<compile_context>
chip_gen: v7x
topology: tpu7x:2x2x1
jax: 0.10.0
libtpu: 0.0.40
codegen_flags: <defaults>
</compile_context>

<pallas_src>
import math

import jax
import jax.numpy as jnp
from jax.experimental import pallas as pl
from jax.experimental.pallas import tpu as pltpu


# ----------------------------------------------------------------------------
# helpers
# ----------------------------------------------------------------------------
def _rup(n, m):
    return ((n + m - 1) // m) * m


def _pad_to(a, shape):
    return jnp.pad(a, [(0, t - s) for s, t in zip(a.shape, shape)])


def _choose_batch_tiling(B):
    """Pad batch only to a multiple of 8, pick a batch tile <= 1024, and give
    the 'parallel' grid axis >= 2 steps once there is enough work (v7x TCs)."""
    B8 = _rup(max(B, 1), 8)
    tb_max = 1024
    steps = -(-B8 // tb_max)
    if steps == 1 and B8 >= 512:
        steps = 2
    tb = _rup(-(-B8 // steps), 8)
    return tb * steps, tb, steps


# ----------------------------------------------------------------------------
# Fused kernel:
#   core  = tanh(tanh(x @ W1 + b1) @ W2 + b2)          (CoreNet forward)
#   probs = per-head softmax(core @ Wcat + bcat)       (all heads, one GEMM)
# All refs are lane-dense VMEM tiles; weights are resident (constant index_map).
# ----------------------------------------------------------------------------
def actor_fused_kernel(x_ref, w1_ref, b1_ref, w2_ref, b2_ref,
                       wh_ref, bh_ref, seg_ref,
                       core_ref, probs_ref):
    # ---- CoreNet (the spec module) ------------------------------------------
    # MXU operands are mm_dtype (bf16 by default, x already cast host-side);
    # accumulation and all elementwise math stay f32 (required on v5e).
    h = jnp.dot(x_ref[...], w1_ref[...], preferred_element_type=jnp.float32)
    h = jnp.tanh(h + b1_ref[...])                              # f32 (tb, H_pad)

    c = jnp.dot(h.astype(w2_ref.dtype), w2_ref[...],
                preferred_element_type=jnp.float32)
    core = jnp.tanh(c + b2_ref[...])                           # f32 (tb, H2_pad)
    core_ref[...] = core.astype(core_ref.dtype)

    # ---- all actor heads: one GEMM + lane-dense per-head softmax ------------
    logits = jnp.dot(core.astype(wh_ref.dtype), wh_ref[...],
                     preferred_element_type=jnp.float32) + bh_ref[...]
    # Row-global max is constant within each head's bin segment, so each
    # per-head softmax is unchanged (shift invariance). Fine for this
    # tanh-bounded model; denom is epsilon-clamped below as insurance.
    # TODO(synk): switch to a masked per-segment max if heads can produce
    # logits spread > ~80 apart within one row (exp underflow).
    m = jnp.max(logits, axis=-1, keepdims=True)
    e = jnp.exp(logits - m)                                    # f32 (tb, NB_pad)
    # Per-head denominator broadcast to every lane of its segment via a
    # block-diagonal 0/1 matmul; padded lanes have their own segment so their
    # denominator never pollutes a real head. Kept f32 + exact divide so each
    # head's probabilities sum to 1 at f32 accuracy.
    denom = jnp.dot(e, seg_ref[...], preferred_element_type=jnp.float32)
    probs_ref[...] = (e / jnp.maximum(denom, 1e-30)).astype(probs_ref.dtype)


def run_actor(xp, packed, tb):
    w1, b1 = packed["w1"], packed["b1"]
    w2, b2 = packed["w2"], packed["b2"]
    wh, bh = packed["wh"], packed["bh"]
    seg = packed["seg"]

    B_pad, n_states = xp.shape
    H_pad, H2_pad, NB_pad = w1.shape[1], w2.shape[1], wh.shape[1]
    assert B_pad % tb == 0
    grid = (B_pad // tb,)

    return pl.pallas_call(
        actor_fused_kernel,
        out_shape=(
            jax.ShapeDtypeStruct((B_pad, H2_pad), jnp.float32),   # CoreNet out
            jax.ShapeDtypeStruct((B_pad, NB_pad), jnp.float32),   # head probs
        ),
        grid=grid,
        in_specs=[
            pl.BlockSpec((tb, n_states), lambda i: (i, 0)),       # x (unpadded K)
            pl.BlockSpec((n_states, H_pad), lambda i: (0, 0)),    # W1 (resident)
            pl.BlockSpec((1, H_pad), lambda i: (0, 0)),           # b1
            pl.BlockSpec((H_pad, H2_pad), lambda i: (0, 0)),      # W2
            pl.BlockSpec((1, H2_pad), lambda i: (0, 0)),          # b2
            pl.BlockSpec((H2_pad, NB_pad), lambda i: (0, 0)),     # Wcat (all heads)
            pl.BlockSpec((1, NB_pad), lambda i: (0, 0)),          # bcat
            pl.BlockSpec((NB_pad, NB_pad), lambda i: (0, 0)),     # segment-sum
        ],
        out_specs=(
            pl.BlockSpec((tb, H2_pad), lambda i: (i, 0)),
            pl.BlockSpec((tb, NB_pad), lambda i: (i, 0)),
        ),
        compiler_params=pltpu.CompilerParams(
            dimension_semantics=("parallel",)),
    )(xp, w1, b1, w2, b2, wh, bh, seg)


# ----------------------------------------------------------------------------
# Parameter init (mimics nn.Linear's U(-1/sqrt(fan_in), +1/sqrt(fan_in)))
# and host-side packing / padding into lane-dense tiles.
# ----------------------------------------------------------------------------
def linear_init(key, fan_in, fan_out):
    kw, kb = jax.random.split(key)
    bound = 1.0 / math.sqrt(fan_in)
    w = jax.random.uniform(kw, (fan_in, fan_out), jnp.float32, -bound, bound)
    b = jax.random.uniform(kb, (1, fan_out), jnp.float32, -bound, bound)
    return w, b


def make_actor_params(key, n_states, n_actions, bins, heads=1,
                      hidden=100, hidden2=50, mm_dtype=jnp.bfloat16):
    k1, k2, kh = jax.random.split(key, 3)
    w1, b1 = linear_init(k1, n_states, hidden)
    w2, b2 = linear_init(k2, hidden, hidden2)

    n_head = heads * n_actions
    head_keys = jax.random.split(kh, n_head)
    ws, bs = [], []
    for hk in head_keys:
        w, b = linear_init(hk, hidden2, bins)
        ws.append(w)
        bs.append(b[None, ...])
    w_heads = jnp.stack(ws, axis=0)          # (N, hidden2, bins)
    b_heads = jnp.concatenate(bs, axis=0)    # (N, 1, bins)

    # ---- packed / padded kernel params --------------------------------------
    H_pad = _rup(hidden, 128)
    H2_pad = _rup(hidden2, 128)
    NB = n_head * bins
    NB_pad = _rup(NB, 128)

    w1p = _pad_to(w1, (n_states, H_pad)).astype(mm_dtype)   # K left unpadded
    b1p = _pad_to(b1, (1, H_pad))                           # f32, zero-padded
    w2p = _pad_to(w2, (H_pad, H2_pad)).astype(mm_dtype)
    b2p = _pad_to(b2, (1, H2_pad))

    # concat all head weights along the output-feature axis (head-major cols)
    wh_cat = jnp.transpose(w_heads, (1, 0, 2)).reshape(hidden2, NB)
    bh_cat = b_heads[:, 0, :].reshape(1, NB)
    whp = _pad_to(wh_cat, (H2_pad, NB_pad)).astype(mm_dtype)
    bhp = _pad_to(bh_cat, (1, NB_pad))                      # f32, zero-padded

    # block-diagonal segment-sum matrix: lanes i, j share a head -> 1.
    # Padded lanes (>= NB) each form their own segment (denom stays > 0 there
    # and they never contaminate a real head's softmax denominator).
    lane = jnp.arange(NB_pad)
    seg_id = jnp.where(lane < NB, lane // bins, lane)
    seg = (seg_id[:, None] == seg_id[None, :]).astype(jnp.float32)

    return dict(
        # unpadded (reference) params
        w1=w1, b1=b1, w2=w2, b2=b2, w_heads=w_heads, b_heads=b_heads,
        # packed kernel params
        packed=dict(w1=w1p, b1=b1p, w2=w2p, b2=b2p, wh=whp, bh=bhp, seg=seg),
        # meta
        heads=heads, n_actions=n_actions, bins=bins,
        hidden=hidden, hidden2=hidden2, n_head=n_head, mm_dtype=mm_dtype,
    )


# ----------------------------------------------------------------------------
# Forward: one pallas_call; only one slice per output on the host (no per-head
# fan-out). probs has shape (B, n_head, bins); consumers index lazily.
# ----------------------------------------------------------------------------
def actor_forward(params, x):
    p = params["packed"]
    B = x.shape[0]
    n_states = p["w1"].shape[0]
    B_pad, tb, _ = _choose_batch_tiling(B)

    xp = _pad_to(x, (B_pad, n_states)).astype(p["w1"].dtype)
    core_pad, probs_pad = run_actor(xp, p, tb)

    hidden2 = params["hidden2"]
    n_head, bins = params["n_head"], params["bins"]

    core = core_pad[:B, :hidden2]                                   # CoreNet out
    probs = probs_pad[:B, :n_head * bins].reshape(B, n_head, bins)
    return core, probs


# ----------------------------------------------------------------------------
# references
# ----------------------------------------------------------------------------
def reference_forward_f32(params, x):
    h = jnp.tanh(x @ params["w1"] + params["b1"])
    core = jnp.tanh(h @ params["w2"] + params["b2"])
    logits = jnp.einsum("bd,ndo->nbo", core, params["w_heads"]) + params["b_heads"]
    probs = jax.nn.softmax(logits, axis=-1)
    return core, jnp.transpose(probs, (1, 0, 2))                    # (B, N, bins)


def reference_forward_matched(params, x):
    """Same cast pattern as the kernel (mm_dtype operands, f32 accumulate)."""
    md = lambda a: a.astype(params["mm_dtype"])
    f32 = jnp.float32
    h = jnp.tanh(jnp.dot(md(x), md(params["w1"]), preferred_element_type=f32)
                 + params["b1"])
    core = jnp.tanh(jnp.dot(md(h), md(params["w2"]), preferred_element_type=f32)
                    + params["b2"])
    logits = jnp.einsum("bd,ndo->nbo", md(core), md(params["w_heads"]),
                        preferred_element_type=f32) + params["b_heads"]
    probs = jax.nn.softmax(logits, axis=-1)
    return core, jnp.transpose(probs, (1, 0, 2))


if __name__ == "__main__":
    key = jax.random.PRNGKey(0)
    kp, kx = jax.random.split(key)

    n_states, n_actions, bins, heads = 8, 3, 10, 1
    batch = 2

    params = make_actor_params(kp, n_states, n_actions, bins, heads=heads)
    x = jax.random.normal(kx, (batch, n_states), jnp.float32)

    core, probs = actor_forward(params, x)
    jax.block_until_ready((core, probs))

    assert core.shape == (batch, params["hidden2"])
    assert probs.shape == (batch, params["n_head"], bins)

    # 1) tight check against a precision-matched reference (same bf16 casts).
    core_m, probs_m = reference_forward_matched(params, x)
    assert jnp.allclose(core, core_m, atol=1e-3, rtol=0.0)
    assert jnp.allclose(probs, probs_m, atol=1e-3, rtol=0.0)

    # 2) sanity check against the pure-f32 reference (bf16 MXU operands ->
    #    generous-but-meaningful tolerances).
    core_ref, probs_ref = reference_forward_f32(params, x)
    assert jnp.allclose(core, core_ref, atol=3e-2, rtol=0.0)
    assert jnp.allclose(probs, probs_ref, atol=1e-2, rtol=0.0)

    # 3) exact divide -> each head's probabilities sum to 1 at f32 accuracy.
    assert jnp.allclose(jnp.sum(probs, axis=-1), 1.0, atol=1e-3)

    print("KERNEL_OK")
</pallas_src>

<mosaic_0001>
module attributes {stable_mosaic.version = 11 : i64} {
  func.func @actor_fused_kernel(%arg0: i32, %arg1: memref<8x8xbf16, #tpu.memory_space<vmem>>, %arg2: memref<8x128xbf16, #tpu.memory_space<vmem>>, %arg3: memref<1x128xf32, #tpu.memory_space<vmem>>, %arg4: memref<128x128xbf16, #tpu.memory_space<vmem>>, %arg5: memref<1x128xf32, #tpu.memory_space<vmem>>, %arg6: memref<128x128xbf16, #tpu.memory_space<vmem>>, %arg7: memref<1x128xf32, #tpu.memory_space<vmem>>, %arg8: memref<128x128xf32, #tpu.memory_space<vmem>>, %arg9: memref<8x128xf32, #tpu.memory_space<vmem>>, %arg10: memref<8x128xf32, #tpu.memory_space<vmem>>) attributes {dimension_semantics = [#tpu.dimension_semantics<parallel>], iteration_bounds = array<i64: 1>, scalar_prefetch = 0 : i64, scratch_operands = 0 : i64, tpu.core_type = #tpu.core_type<tc>, window_params = [{transform_indices = @transform_0, window_bounds = array<i64: 8, 8>}, {pipeline_mode = #tpu.pipeline_mode<synchronous>, transform_indices = @transform_1, window_bounds = array<i64: 8, 128>}, {pipeline_mode = #tpu.pipeline_mode<synchronous>, transform_indices = @transform_2, window_bounds = array<i64: 1, 128>}, {pipeline_mode = #tpu.pipeline_mode<synchronous>, transform_indices = @transform_3, window_bounds = array<i64: 128, 128>}, {pipeline_mode = #tpu.pipeline_mode<synchronous>, transform_indices = @transform_4, window_bounds = array<i64: 1, 128>}, {pipeline_mode = #tpu.pipeline_mode<synchronous>, transform_indices = @transform_5, window_bounds = array<i64: 128, 128>}, {pipeline_mode = #tpu.pipeline_mode<synchronous>, transform_indices = @transform_6, window_bounds = array<i64: 1, 128>}, {pipeline_mode = #tpu.pipeline_mode<synchronous>, transform_indices = @transform_7, window_bounds = array<i64: 128, 128>}, {transform_indices = @transform_8, window_bounds = array<i64: 8, 128>}, {transform_indices = @transform_9, window_bounds = array<i64: 8, 128>}]} {
    %c0 = arith.constant 0 : index
    %c0_0 = arith.constant 0 : index
    %0 = vector.load %arg1[%c0, %c0_0] : memref<8x8xbf16, #tpu.memory_space<vmem>>, vector<8x8xbf16>
    %c0_1 = arith.constant 0 : index
    %c0_2 = arith.constant 0 : index
    %1 = vector.load %arg2[%c0_1, %c0_2] : memref<8x128xbf16, #tpu.memory_space<vmem>>, vector<8x128xbf16>
    %cst = arith.constant dense<0.000000e+00> : vector<8x128xf32>
    %2 = tpu.matmul %0, %1, %cst {dimension_numbers = #tpu.dot_dimension_numbers<[1], [0], [0], [1], [0, 0, 1, 1], [], []>} : vector<8x8xbf16>, vector<8x128xbf16>, vector<8x128xf32> -> vector<8x128xf32>
    %c0_3 = arith.constant 0 : index
    %c0_4 = arith.constant 0 : index
    %3 = vector.load %arg3[%c0_3, %c0_4] : memref<1x128xf32, #tpu.memory_space<vmem>>, vector<1x128xf32>
    %4 = vector.broadcast %3 : vector<1x128xf32> to vector<8x128xf32>
    %5 = arith.addf %2, %4 : vector<8x128xf32>
    %6 = math.tanh %5 : vector<8x128xf32>
    %7 = arith.truncf %6 : vector<8x128xf32> to vector<8x128xbf16>
    %c0_5 = arith.constant 0 : index
    %c0_6 = arith.constant 0 : index
    %8 = vector.load %arg4[%c0_5, %c0_6] : memref<128x128xbf16, #tpu.memory_space<vmem>>, vector<128x128xbf16>
    %cst_7 = arith.constant dense<0.000000e+00> : vector<8x128xf32>
    %9 = tpu.matmul %7, %8, %cst_7 {dimension_numbers = #tpu.dot_dimension_numbers<[1], [0], [0], [1], [0, 0, 1, 1], [], []>} : vector<8x128xbf16>, vector<128x128xbf16>, vector<8x128xf32> -> vector<8x128xf32>
    %c0_8 = arith.constant 0 : index
    %c0_9 = arith.constant 0 : index
    %10 = vector.load %arg5[%c0_8, %c0_9] : memref<1x128xf32, #tpu.memory_space<vmem>>, vector<1x128xf32>
    %11 = vector.broadcast %10 : vector<1x128xf32> to vector<8x128xf32>
    %12 = arith.addf %9, %11 : vector<8x128xf32>
    %13 = math.tanh %12 : vector<8x128xf32>
    %c0_10 = arith.constant 0 : index
    %c0_11 = arith.constant 0 : index
    %14 = vector.load %arg9[%c0_10, %c0_11] : memref<8x128xf32, #tpu.memory_space<vmem>>, vector<8x128xf32>
    tpu.vector_store %arg9[%c0_10, %c0_11], %13 {strides = array<i32>} : memref<8x128xf32, #tpu.memory_space<vmem>>, vector<8x128xf32>,
    %15 = arith.truncf %13 : vector<8x128xf32> to vector<8x128xbf16>
    %c0_12 = arith.constant 0 : index
    %c0_13 = arith.constant 0 : index
    %16 = vector.load %arg6[%c0_12, %c0_13] : memref<128x128xbf16, #tpu.memory_space<vmem>>, vector<128x128xbf16>
    %cst_14 = arith.constant dense<0.000000e+00> : vector<8x128xf32>
    %17 = tpu.matmul %15, %16, %cst_14 {dimension_numbers = #tpu.dot_dimension_numbers<[1], [0], [0], [1], [0, 0, 1, 1], [], []>} : vector<8x128xbf16>, vector<128x128xbf16>, vector<8x128xf32> -> vector<8x128xf32>
    %c0_15 = arith.constant 0 : index
    %c0_16 = arith.constant 0 : index
    %18 = vector.load %arg7[%c0_15, %c0_16] : memref<1x128xf32, #tpu.memory_space<vmem>>, vector<1x128xf32>
    %19 = vector.broadcast %18 : vector<1x128xf32> to vector<8x128xf32>
    %20 = arith.addf %17, %19 : vector<8x128xf32>
    %cst_17 = arith.constant dense<0xFF800000> : vector<8xf32>
    %21 = vector.multi_reduction <maximumf>, %20, %cst_17 [1] : vector<8x128xf32> to vector<8xf32>
    %22 = vector.shape_cast %21 : vector<8xf32> to vector<8x1xf32>
    %23 = vector.broadcast %22 : vector<8x1xf32> to vector<8x128xf32>
    %24 = arith.subf %20, %23 : vector<8x128xf32>
    %25 = math.exp %24 : vector<8x128xf32>
    %c0_18 = arith.constant 0 : index
    %c0_19 = arith.constant 0 : index
    %26 = vector.load %arg8[%c0_18, %c0_19] : memref<128x128xf32, #tpu.memory_space<vmem>>, vector<128x128xf32>
    %cst_20 = arith.constant dense<0.000000e+00> : vector<8x128xf32>
    %27 = tpu.matmul %25, %26, %cst_20 {dimension_numbers = #tpu.dot_dimension_numbers<[1], [0], [0], [1], [0, 0, 1, 1], [], []>} : vector<8x128xf32>, vector<128x128xf32>, vector<8x128xf32> -> vector<8x128xf32>
    %cst_21 = arith.constant 1.000000e-30 : f32
    %28 = vector.broadcast %cst_21 : f32 to vector<8x128xf32>
    %29 = arith.maximumf %27, %28 : vector<8x128xf32>
    %30 = arith.divf %25, %29 : vector<8x128xf32>
    %c0_22 = arith.constant 0 : index
    %c0_23 = arith.constant 0 : index
    %31 = vector.load %arg10[%c0_22, %c0_23] : memref<8x128xf32, #tpu.memory_space<vmem>>, vector<8x128xf32>
    tpu.vector_store %arg10[%c0_22, %c0_23], %30 {strides = array<i32>} : memref<8x128xf32, #tpu.memory_space<vmem>>, vector<8x128xf32>,
    return
  }
  func.func @transform_0(%arg0: i32) -> (i32, i32) {
    %c0_i32 = arith.constant 0 : i32
    %c0_i32_0 = arith.constant 0 : i32
    return %arg0, %c0_i32 : i32, i32
  }
  func.func @transform_1(%arg0: i32) -> (i32, i32) {
    %c0_i32 = arith.constant 0 : i32
    %c0_i32_0 = arith.constant 0 : i32
    %c0_i32_1 = arith.constant 0 : i32
    return %c0_i32, %c0_i32_0 : i32, i32
  }
  func.func @transform_2(%arg0: i32) -> (i32, i32) {
    %c0_i32 = arith.constant 0 : i32
    %c0_i32_0 = arith.constant 0 : i32
    %c0_i32_1 = arith.constant 0 : i32
    return %c0_i32, %c0_i32_0 : i32, i32
  }
  func.func @transform_3(%arg0: i32) -> (i32, i32) {
    %c0_i32 = arith.constant 0 : i32
    %c0_i32_0 = arith.constant 0 : i32
    %c0_i32_1 = arith.constant 0 : i32
    return %c0_i32, %c0_i32_0 : i32, i32
  }
  func.func @transform_4(%arg0: i32) -> (i32, i32) {
    %c0_i32 = arith.constant 0 : i32
    %c0_i32_0 = arith.constant 0 : i32
    %c0_i32_1 = arith.constant 0 : i32
    return %c0_i32, %c0_i32_0 : i32, i32
  }
  func.func @transform_5(%arg0: i32) -> (i32, i32) {
    %c0_i32 = arith.constant 0 : i32
    %c0_i32_0 = arith.constant 0 : i32
    %c0_i32_1 = arith.constant 0 : i32
    return %c0_i32, %c0_i32_0 : i32, i32
  }
  func.func @transform_6(%arg0: i32) -> (i32, i32) {
    %c0_i32 = arith.constant 0 : i32
    %c0_i32_0 = arith.constant 0 : i32
    %c0_i32_1 = arith.constant 0 : i32
    return %c0_i32, %c0_i32_0 : i32, i32
  }
  func.func @transform_7(%arg0: i32) -> (i32, i32) {
    %c0_i32 = arith.constant 0 : i32
    %c0_i32_0 = arith.constant 0 : i32
    %c0_i32_1 = arith.constant 0 : i32
    return %c0_i32, %c0_i32_0 : i32, i32
  }
  func.func @transform_8(%arg0: i32) -> (i32, i32) {
    %c0_i32 = arith.constant 0 : i32
    %c0_i32_0 = arith.constant 0 : i32
    return %arg0, %c0_i32 : i32, i32
  }
  func.func @transform_9(%arg0: i32) -> (i32, i32) {
    %c0_i32 = arith.constant 0 : i32
    %c0_i32_0 = arith.constant 0 : i32
    return %arg0, %c0_i32 : i32, i32
  }
}

</mosaic_0001>

<llo_original>
// kernel: tpu_custom_call.1
$region0: #{tpu_custom_call.1}
  #allocation0 [shape = 'u32[]', space=smem, size = 0x4, offset = 0x4, fixed_abs, tag = 'smem constant byte address 0x4 - core index']
  #allocation1 [shape = 'u32[144,128]{1,0:T(1,128)}', space=vmem, size = 0x12000, scoped, tag = 'internal scratch']
  %s0 = inlined_call_operand.hbm [shape: bf16[8,8], index: 0, kind: input, shape index: {}]
  %s1 = inlined_call_operand.hbm [shape: bf16[8,128], index: 1, kind: input, shape index: {}]
  %s2 = inlined_call_operand.vmem [shape: f32[1,128], index: 2, kind: input, shape index: {}]
  %s3 = inlined_call_operand.hbm [shape: bf16[128,128], index: 3, kind: input, shape index: {}]
  %s4 = inlined_call_operand.vmem [shape: f32[1,128], index: 4, kind: input, shape index: {}]
  %s5 = inlined_call_operand.hbm [shape: bf16[128,128], index: 5, kind: input, shape index: {}]
  %s6 = inlined_call_operand.vmem [shape: f32[1,128], index: 6, kind: input, shape index: {}]
  %s7 = inlined_call_operand.hbm [shape: f32[128,128], index: 7, kind: input, shape index: {}]
  %s8 = inlined_call_operand.hbm [shape: f32[8,128], index: 8, kind: output, shape index: {0}]
  %s9 = inlined_call_operand.hbm [shape: f32[8,128], index: 9, kind: output, shape index: {1}]
  %10 = xla_tuple %s8, %s9
  %s11 = sld [smem:[#allocation0]]
  $region70: #{tpu_custom_call.1} parent=0
    _
  %s13 = ssub.s32 1, %s11
  %s14 = scalar_select 0, %s13, %s11
  $region1: #{tpu_custom_call.1} parent=0
    #allocation2 [shape = 'u8[2048]{0}', space=vmem, size = 0x800, scoped, tag = 'input window, operand 0, single buffered']
    #allocation3 [shape = 's32[1]{0}', space=sflag, size = 0x4, scoped, tag = 'scoped memory for tpu_custom_call.1']
    #allocation4 [shape = 's32[1]{0}', space=sflag, size = 0x4, scoped, tag = 'scoped memory for tpu_custom_call.1']
    #allocation5 [shape = 'u8[2048]{0}', space=vmem, size = 0x800, scoped, tag = 'input window, operand 1, single buffered']
    #allocation6 [shape = 's32[1]{0}', space=sflag, size = 0x4, scoped, tag = 'scoped memory for tpu_custom_call.1']
    #allocation7 [shape = 'u8[32768]{0}', space=vmem, size = 0x8000, scoped, tag = 'input window, operand 3, single buffered']
    #allocation8 [shape = 'u8[32768]{0}', space=vmem, size = 0x8000, scoped, tag = 'input window, operand 5, single buffered']
    #allocation9 [shape = 's32[1]{0}', space=sflag, size = 0x4, scoped, tag = 'scoped memory for tpu_custom_call.1']
    #allocation10 [shape = 'u8[65536]{0}', space=vmem, size = 0x10000, scoped, tag = 'input window, operand 7, single buffered']
    #allocation11 [shape = 'u8[4096]{0}', space=vmem, size = 0x1000, scoped, tag = 'output window, operand 0, single buffered']
    #allocation12 [shape = 'u8[4096]{0}', space=vmem, size = 0x1000, scoped, tag = 'output window, operand 1, single buffered']
    #allocation13 [shape = 's32[1]{0}', space=sflag, size = 0x4, scoped, tag = 'scoped memory for tpu_custom_call.1']
    %15 = vsyncpa [#allocation3], 0
    %16 = vsyncpa [#allocation6], 0
    %17 = vsyncpa [#allocation9], 0
    %18 = vsyncpa [#allocation4], 0
    %19 = vsyncpa [#allocation13], 0
    // Predicated region
    $region2: #{tpu_custom_call.1} parent=1 // pred_check
      _
    $region3: #{tpu_custom_call.1} parent=1 // pred_check_branch
      %21 = sbr.rel (0) target = $region5
    $region4: #{tpu_custom_call.1} parent=1 // pred_region
      %s23 = ssub.s32 64, 64
      %24 = vsyncadd [#allocation3], %s23
      %s26 = sshll.u32 [#allocation2], 4
      %s27 = int_to_ptr.vmem [resolvable:$true] %s26
      %29 = dma.hbm_to_vmem [thread:$0]  %s0, 64, %s27, [#allocation3]
    $region5: #{tpu_custom_call.1} parent=1 // pred_fallthru
      _
    // Predicated region
    $region6: #{tpu_custom_call.1} parent=1 // pred_check
      _
    $region7: #{tpu_custom_call.1} parent=1 // pred_check_branch
      %31 = sbr.rel (0) target = $region9
    $region8: #{tpu_custom_call.1} parent=1 // pred_region
      %s33 = ssub.s32 64, 64
      %34 = vsyncadd [#allocation6], %s33
      %s36 = sshll.u32 [#allocation5], 4
      %s37 = int_to_ptr.vmem [resolvable:$true] %s36
      %39 = dma.hbm_to_vmem [thread:$0]  %s1, 64, %s37, [#allocation6]
    $region9: #{tpu_custom_call.1} parent=1 // pred_fallthru
      _
    // Predicated region
    $region10: #{tpu_custom_call.1} parent=1 // pred_check
      _
    $region11: #{tpu_custom_call.1} parent=1 // pred_check_branch
      %41 = sbr.rel (0) target = $region13
    $region12: #{tpu_custom_call.1} parent=1 // pred_region
      _
    $region13: #{tpu_custom_call.1} parent=1 // pred_fallthru
      _
    // Predicated region
    $region14: #{tpu_custom_call.1} parent=1 // pred_check
      _
    $region15: #{tpu_custom_call.1} parent=1 // pred_check_branch
      %43 = sbr.rel (0) target = $region17
    $region16: #{tpu_custom_call.1} parent=1 // pred_region
      %s45 = ssub.s32 1024, 1024
      %46 = vsyncadd [#allocation6], %s45
      %s47 = sshll.u32 [#allocation7], 4
      %s48 = int_to_ptr.vmem [resolvable:$true] %s47
      %53 = dma.hbm_to_vmem [thread:$0]  %s3, 1024, %s48, [#allocation6], 64, 64, 4
    $region17: #{tpu_custom_call.1} parent=1 // pred_fallthru
      _
    // Predicated region
    $region18: #{tpu_custom_call.1} parent=1 // pred_check
      _
    $region19: #{tpu_custom_call.1} parent=1 // pred_check_branch
      %55 = sbr.rel (0) target = $region21
    $region20: #{tpu_custom_call.1} parent=1 // pred_region
      _
    $region21: #{tpu_custom_call.1} parent=1 // pred_fallthru
      _
    // Predicated region
    $region22: #{tpu_custom_call.1} parent=1 // pred_check
      _
    $region23: #{tpu_custom_call.1} parent=1 // pred_check_branch
      %57 = sbr.rel (0) target = $region25
    $region24: #{tpu_custom_call.1} parent=1 // pred_region
      %s59 = ssub.s32 1024, 1024
      %60 = vsyncadd [#allocation9], %s59
      %s61 = sshll.u32 [#allocation8], 4
      %s62 = int_to_ptr.vmem [resolvable:$true] %s61
      %67 = dma.hbm_to_vmem [thread:$0]  %s5, 1024, %s62, [#allocation9], 64, 64, 4
    $region25: #{tpu_custom_call.1} parent=1 // pred_fallthru
      _
    // Predicated region
    $region26: #{tpu_custom_call.1} parent=1 // pred_check
      _
    $region27: #{tpu_custom_call.1} parent=1 // pred_check_branch
      %69 = sbr.rel (0) target = $region29
    $region28: #{tpu_custom_call.1} parent=1 // pred_region
      _
    $region29: #{tpu_custom_call.1} parent=1 // pred_fallthru
      _
    // Predicated region
    $region30: #{tpu_custom_call.1} parent=1 // pred_check
      _
    $region31: #{tpu_custom_call.1} parent=1 // pred_check_branch
      %71 = sbr.rel (0) target = $region33
    $region32: #{tpu_custom_call.1} parent=1 // pred_region
      %s73 = ssub.s32 2048, 2048
      %74 = vsyncadd [#allocation9], %s73
      %s75 = sshll.u32 [#allocation10], 4
      %s76 = int_to_ptr.vmem [resolvable:$true] %s75
      %81 = dma.hbm_to_vmem [thread:$0]  %s7, 2048, %s76, [#allocation9], 128, 128, 8
    $region33: #{tpu_custom_call.1} parent=1 // pred_fallthru
      _
    // Predicated region
    $region34: #{tpu_custom_call.1} parent=1 // pred_check
      _
    $region35: #{tpu_custom_call.1} parent=1 // pred_check_branch
      %83 = sbr.rel (0) target = $region37
    $region36: #{tpu_custom_call.1} parent=1 // pred_region
      %84 = dma.done [#allocation3], 64
    $region37: #{tpu_custom_call.1} parent=1 // pred_fallthru
      _
    // Predicated region
    $region38: #{tpu_custom_call.1} parent=1 // pred_check
      _
    $region39: #{tpu_custom_call.1} parent=1 // pred_check_branch
      %86 = sbr.rel (0) target = $region41
    $region40: #{tpu_custom_call.1} parent=1 // pred_region
      %87 = dma.done [#allocation6], 64
    $region41: #{tpu_custom_call.1} parent=1 // pred_fallthru
      _
    // Predicated region
    $region42: #{tpu_custom_call.1} parent=1 // pred_check
      _
    $region43: #{tpu_custom_call.1} parent=1 // pred_check_branch
      %89 = sbr.rel (0) target = $region45
    $region44: #{tpu_custom_call.1} parent=1 // pred_region
      %90 = dma.done [#allocation6], 1024
    $region45: #{tpu_custom_call.1} parent=1 // pred_fallthru
      _
    // Predicated region
    $region46: #{tpu_custom_call.1} parent=1 // pred_check
      _
    $region47: #{tpu_custom_call.1} parent=1 // pred_check_branch
      %92 = sbr.rel (0) target = $region49
    $region48: #{tpu_custom_call.1} parent=1 // pred_region
      %93 = dma.done [#allocation9], 1024
    $region49: #{tpu_custom_call.1} parent=1 // pred_fallthru
      _
    // Predicated region
    $region50: #{tpu_custom_call.1} parent=1 // pred_check
      _
    $region51: #{tpu_custom_call.1} parent=1 // pred_check_branch
      %95 = sbr.rel (0) target = $region53
    $region52: #{tpu_custom_call.1} parent=1 // pred_region
      %96 = dma.done [#allocation9], 2048
    $region53: #{tpu_custom_call.1} parent=1 // pred_fallthru
      _
    %v98 = vld [vmem:[#allocation2] sm:$0xf]
    %v99 = vld [vmem:[#allocation5] sm:$0xf]
    %v100 = vld [vmem:[%s2] sm:$0x1]
    %v102 = vlaneseq
    %v103 = vshrl.u32 %v102, 7
    %v104 = vsub.s32 0, %v103
    %v105 = vrot.slane %v100, %v104
    %vm107 = vcmask 64512
    %v109 = vsel %vm107, %v98, 0
    %vm111 = vcmask 1043456
    %v113 = vsel %vm111, %v99, 0
    %115 = vmatprep.subr.bf16.mxu0 0
    %116 = vmatpush1.bf16.msra.mxu0 %v113
    %117 = vmatprep.subr.bf16.mxu0 0
    %118 = vmatpush1.bf16.msra.mxu0 0
    %119 = vmatprep.subr.bf16.mxu0 0
    %120 = vmatpush1.bf16.msra.mxu0 0
    %121 = vmatprep.subr.bf16.mxu0 0
    %122 = vmatpush1.bf16.msra.mxu0 0
    %123 = vmatprep.subr.bf16.mxu0 0
    %124 = vmatpush1.bf16.msra.mxu0 0
    %125 = vmatprep.subr.bf16.mxu0 0
    %126 = vmatpush1.bf16.msra.mxu0 0
    %127 = vmatprep.subr.bf16.mxu0 0
    %128 = vmatpush1.bf16.msra.mxu0 0
    %129 = vmatprep.subr.bf16.mxu0 0
    %130 = vmatpush1.bf16.msra.mxu0 0
    %131 = vmatprep.subr.bf16.mxu0 0
    %132 = vmatpush1.bf16.msra.mxu0 0
    %133 = vmatprep.subr.bf16.mxu0 0
    %134 = vmatpush1.bf16.msra.mxu0 0
    %135 = vmatprep.subr.bf16.mxu0 0
    %136 = vmatpush1.bf16.msra.mxu0 0
    %137 = vmatprep.subr.bf16.mxu0 0
    %138 = vmatpush1.bf16.msra.mxu0 0
    %139 = vmatprep.subr.bf16.mxu0 0
    %140 = vmatpush1.bf16.msra.mxu0 0
    %141 = vmatprep.subr.bf16.mxu0 0
    %142 = vmatpush1.bf16.msra.mxu0 0
    %143 = vmatprep.subr.bf16.mxu0 0
    %144 = vmatpush1.bf16.msra.mxu0 0
    %145 = vmatprep.subr.bf16.mxu0 0
    %146 = vmatpush1.bf16.msra.mxu0 0
    %147 = vmatprep.mubr.bf16.mxu0 0
    %148 = vmatmul.mubr.bf16.gmra.mrb[0].mxu0 %v109
    %v149 = vpop.f32.mrb[0].mxu0
    %v150 = vadd.f32 %v105, %v149
    %v151 = vpop.f32.mrb[0].mxu0
    %v152 = vpop.f32.mrb[0].mxu0
    %v153 = vpop.f32.mrb[0].mxu0
    %154 = vdwg.mxu0
    %v155 = vtanh.pop %v150
    %v156 = vpack.c.bf16 %v155, %v155
    %v157 = vld [vmem:[#allocation7] sm:$0xf]
    %v158 = vld [vmem:[#allocation7 + $0x4] sm:$0xf]
    %v159 = vld [vmem:[#allocation7 + $0x8] sm:$0xf]
    %v160 = vld [vmem:[#allocation7 + $0xc] sm:$0xf]
    %v161 = vld [vmem:[#allocation7 + $0x10] sm:$0xf]
    %v162 = vld [vmem:[#allocation7 + $0x14] sm:$0xf]
    %v163 = vld [vmem:[#allocation7 + $0x18] sm:$0xf]
    %v164 = vld [vmem:[#allocation7 + $0x1c] sm:$0xf]
    %v165 = vld [vmem:[#allocation7 + $0x20] sm:$0xf]
    %v166 = vld [vmem:[#allocation7 + $0x24] sm:$0xf]
    %v167 = vld [vmem:[#allocation7 + $0x28] sm:$0xf]
    %v168 = vld [vmem:[#allocation7 + $0x2c] sm:$0xf]
    %v169 = vld [vmem:[#allocation7 + $0x30] sm:$0xf]
    %v170 = vld [vmem:[#allocation7 + $0x34] sm:$0xf]
    %v171 = vld [vmem:[#allocation7 + $0x38] sm:$0xf]
    %v172 = vld [vmem:[#allocation7 + $0x3c] sm:$0xf]
    %v173 = vld [vmem:[%s4] sm:$0x1]
    %v175 = vlaneseq
    %v176 = vshrl.u32 %v175, 7
    %v177 = vsub.s32 0, %v176
    %v178 = vrot.slane %v173, %v177
    %v196 = vunpack.c.l.b16 %v157
    %v197 = vunpack.c.l.b16 %v158
    %v198 = vunpack.c.l.b16 %v159
    %v199 = vunpack.c.l.b16 %v160
    %v200 = vunpack.c.l.b16 %v161
    %v201 = vunpack.c.l.b16 %v162
    %v202 = vunpack.c.l.b16 %v163
    %v203 = vunpack.c.l.b16 %v164
    %v204 = vunpack.c.l.b16 %v165
    %v205 = vunpack.c.l.b16 %v166
    %v206 = vunpack.c.l.b16 %v167
    %v207 = vunpack.c.l.b16 %v168
    %v208 = vunpack.c.l.b16 %v169
    %v209 = vunpack.c.l.b16 %v170
    %v210 = vunpack.c.l.b16 %v171
    %v211 = vunpack.c.l.b16 %v172
    %v212 = vpack.c.b16 %v197, %v196
    %v213 = vpack.c.b16 %v199, %v198
    %v214 = vpack.c.b16 %v201, %v200
    %v215 = vpack.c.b16 %v203, %v202
    %v216 = vpack.c.b16 %v205, %v204
    %v217 = vpack.c.b16 %v207, %v206
    %v218 = vpack.c.b16 %v209, %v208
    %v219 = vpack.c.b16 %v211, %v210
    %228 = vmatprep.subr.bf16.mxu0 0
    %229 = vmatpush1.bf16.msra.mxu0 %v212
    %230 = vmatprep.subr.bf16.mxu0 0
    %231 = vmatpush1.bf16.msra.mxu0 %v213
    %232 = vmatprep.subr.bf16.mxu0 0
    %233 = vmatpush1.bf16.msra.mxu0 %v214
    %234 = vmatprep.subr.bf16.mxu0 0
    %235 = vmatpush1.bf16.msra.mxu0 %v215
    %236 = vmatprep.subr.bf16.mxu0 0
    %237 = vmatpush1.bf16.msra.mxu0 %v216
    %238 = vmatprep.subr.bf16.mxu0 0
    %239 = vmatpush1.bf16.msra.mxu0 %v217
    %240 = vmatprep.subr.bf16.mxu0 0
    %241 = vmatpush1.bf16.msra.mxu0 %v218
    %242 = vmatprep.subr.bf16.mxu0 0
    %243 = vmatpush1.bf16.msra.mxu0 %v219
    %244 = vmatprep.subr.bf16.mxu0 0
    %245 = vmatpush1.bf16.msra.mxu0 0
    %246 = vmatprep.subr.bf16.mxu0 0
    %247 = vmatpush1.bf16.msra.mxu0 0
    %248 = vmatprep.subr.bf16.mxu0 0
    %249 = vmatpush1.bf16.msra.mxu0 0
    %250 = vmatprep.subr.bf16.mxu0 0
    %251 = vmatpush1.bf16.msra.mxu0 0
    %252 = vmatprep.subr.bf16.mxu0 0
    %253 = vmatpush1.bf16.msra.mxu0 0
    %254 = vmatprep.subr.bf16.mxu0 0
    %255 = vmatpush1.bf16.msra.mxu0 0
    %256 = vmatprep.subr.bf16.mxu0 0
    %257 = vmatpush1.bf16.msra.mxu0 0
    %258 = vmatprep.subr.bf16.mxu0 0
    %259 = vmatpush1.bf16.msra.mxu0 0
    %260 = vmatprep.mubr.bf16.mxu0 0
    %261 = vmatmul.mubr.bf16.gmra.mrb[0].mxu0 %v156
    %v262 = vpop.f32.mrb[0].mxu0
    %v263 = vadd.f32 %v178, %v262
    %v264 = vpop.f32.mrb[0].mxu0
    %v265 = vpop.f32.mrb[0].mxu0
    %v266 = vpop.f32.mrb[0].mxu0
    %267 = vdwg.mxu0
    %v268 = vtanh.pop %v263
    %269 = vst [vmem:[#allocation11] sm:$0xff] %v268
    %v270 = vpack.c.bf16 %v268, %v268
    %v271 = vld [vmem:[#allocation8] sm:$0xf]
    %v272 = vld [vmem:[#allocation8 + $0x4] sm:$0xf]
    %v273 = vld [vmem:[#allocation8 + $0x8] sm:$0xf]
    %v274 = vld [vmem:[#allocation8 + $0xc] sm:$0xf]
    %v275 = vld [vmem:[#allocation8 + $0x10] sm:$0xf]
    %v276 = vld [vmem:[#allocation8 + $0x14] sm:$0xf]
    %v277 = vld [vmem:[#allocation8 + $0x18] sm:$0xf]
    %v278 = vld [vmem:[#allocation8 + $0x1c] sm:$0xf]
    %v279 = vld [vmem:[#allocation8 + $0x20] sm:$0xf]
    %v280 = vld [vmem:[#allocation8 + $0x24] sm:$0xf]
    %v281 = vld [vmem:[#allocation8 + $0x28] sm:$0xf]
    %v282 = vld [vmem:[#allocation8 + $0x2c] sm:$0xf]
    %v283 = vld [vmem:[#allocation8 + $0x30] sm:$0xf]
    %v284 = vld [vmem:[#allocation8 + $0x34] sm:$0xf]
    %v285 = vld [vmem:[#allocation8 + $0x38] sm:$0xf]
    %v286 = vld [vmem:[#allocation8 + $0x3c] sm:$0xf]
    %v287 = vld [vmem:[%s6] sm:$0x1]
    %v289 = vlaneseq
    %v290 = vshrl.u32 %v289, 7
    %v291 = vsub.s32 0, %v290
    %v292 = vrot.slane %v287, %v291
    %v310 = vunpack.c.l.b16 %v271
    %v311 = vunpack.c.l.b16 %v272
    %v312 = vunpack.c.l.b16 %v273
    %v313 = vunpack.c.l.b16 %v274
    %v314 = vunpack.c.l.b16 %v275
    %v315 = vunpack.c.l.b16 %v276
    %v316 = vunpack.c.l.b16 %v277
    %v317 = vunpack.c.l.b16 %v278
    %v318 = vunpack.c.l.b16 %v279
    %v319 = vunpack.c.l.b16 %v280
    %v320 = vunpack.c.l.b16 %v281
    %v321 = vunpack.c.l.b16 %v282
    %v322 = vunpack.c.l.b16 %v283
    %v323 = vunpack.c.l.b16 %v284
    %v324 = vunpack.c.l.b16 %v285
    %v325 = vunpack.c.l.b16 %v286
    %v326 = vpack.c.b16 %v311, %v310
    %v327 = vpack.c.b16 %v313, %v312
    %v328 = vpack.c.b16 %v315, %v314
    %v329 = vpack.c.b16 %v317, %v316
    %v330 = vpack.c.b16 %v319, %v318
    %v331 = vpack.c.b16 %v321, %v320
    %v332 = vpack.c.b16 %v323, %v322
    %v333 = vpack.c.b16 %v325, %v324
    %342 = vmatprep.subr.bf16.mxu0 0
    %343 = vmatpush1.bf16.msra.mxu0 %v326
    %344 = vmatprep.subr.bf16.mxu0 0
    %345 = vmatpush1.bf16.msra.mxu0 %v327
    %346 = vmatprep.subr.bf16.mxu0 0
    %347 = vmatpush1.bf16.msra.mxu0 %v328
    %348 = vmatprep.subr.bf16.mxu0 0
    %349 = vmatpush1.bf16.msra.mxu0 %v329
    %350 = vmatprep.subr.bf16.mxu0 0
    %351 = vmatpush1.bf16.msra.mxu0 %v330
    %352 = vmatprep.subr.bf16.mxu0 0
    %353 = vmatpush1.bf16.msra.mxu0 %v331
    %354 = vmatprep.subr.bf16.mxu0 0
    %355 = vmatpush1.bf16.msra.mxu0 %v332
    %356 = vmatprep.subr.bf16.mxu0 0
    %357 = vmatpush1.bf16.msra.mxu0 %v333
    %358 = vmatprep.subr.bf16.mxu0 0
    %359 = vmatpush1.bf16.msra.mxu0 0
    %360 = vmatprep.subr.bf16.mxu0 0
    %361 = vmatpush1.bf16.msra.mxu0 0
    %362 = vmatprep.subr.bf16.mxu0 0
    %363 = vmatpush1.bf16.msra.mxu0 0
    %364 = vmatprep.subr.bf16.mxu0 0
    %365 = vmatpush1.bf16.msra.mxu0 0
    %366 = vmatprep.subr.bf16.mxu0 0
    %367 = vmatpush1.bf16.msra.mxu0 0
    %368 = vmatprep.subr.bf16.mxu0 0
    %369 = vmatpush1.bf16.msra.mxu0 0
    %370 = vmatprep.subr.bf16.mxu0 0
    %371 = vmatpush1.bf16.msra.mxu0 0
    %372 = vmatprep.subr.bf16.mxu0 0
    %373 = vmatpush1.bf16.msra.mxu0 0
    %374 = vmatprep.mubr.bf16.mxu0 0
    %375 = vmatmul.mubr.bf16.gmra.mrb[0].mxu0 %v270
    %v376 = vpop.f32.mrb[0].mxu0
    %v377 = vadd.f32 %v292, %v376
    %v378 = vpop.f32.mrb[0].mxu0
    %v379 = vpop.f32.mrb[0].mxu0
    %v380 = vpop.f32.mrb[0].mxu0
    %381 = vdwg.mxu0
    %382 = vmax.xlane.f32.xlu0 %v377
    %v383 = vpop.xlane.xlu0 %382
    %v384 = vsub.f32 %v377, %v383
    %v385 = vmul.f32 %v384, 1.442695
    %v386 = vpow.pop %v385
    %v387 = vld [vmem:[#allocation10] sm:$0xff]
    %v388 = vld [vmem:[#allocation10 + $0x8] sm:$0xff]
    %v389 = vld [vmem:[#allocation10 + $0x10] sm:$0xff]
    %v390 = vld [vmem:[#allocation10 + $0x18] sm:$0xff]
    %v391 = vld [vmem:[#allocation10 + $0x20] sm:$0xff]
    %v392 = vld [vmem:[#allocation10 + $0x28] sm:$0xff]
    %v393 = vld [vmem:[#allocation10 + $0x30] sm:$0xff]
    %v394 = vld [vmem:[#allocation10 + $0x38] sm:$0xff]
    %v395 = vld [vmem:[#allocation10 + $0x40] sm:$0xff]
    %v396 = vld [vmem:[#allocation10 + $0x48] sm:$0xff]
    %v397 = vld [vmem:[#allocation10 + $0x50] sm:$0xff]
    %v398 = vld [vmem:[#allocation10 + $0x58] sm:$0xff]
    %v399 = vld [vmem:[#allocation10 + $0x60] sm:$0xff]
    %v400 = vld [vmem:[#allocation10 + $0x68] sm:$0xff]
    %v401 = vld [vmem:[#allocation10 + $0x70] sm:$0xff]
    %v402 = vld [vmem:[#allocation10 + $0x78] sm:$0xff]
    %403 = vmatprep.subr.mxu0 0.0
    %404 = vmatpush1.msra.mxu0 %v387
    %405 = vmatprep.subr.mxu0 0.0
    %406 = vmatpush1.msra.mxu0 %v388
    %407 = vmatprep.subr.mxu0 0.0
    %408 = vmatpush1.msra.mxu0 %v389
    %409 = vmatprep.subr.mxu0 0.0
    %410 = vmatpush1.msra.mxu0 %v390
    %411 = vmatprep.subr.mxu0 0.0
    %412 = vmatpush1.msra.mxu0 %v391
    %413 = vmatprep.subr.mxu0 0.0
    %414 = vmatpush1.msra.mxu0 %v392
    %415 = vmatprep.subr.mxu0 0.0
    %416 = vmatpush1.msra.mxu0 %v393
    %417 = vmatprep.subr.mxu0 0.0
    %418 = vmatpush1.msra.mxu0 %v394
    %419 = vmatprep.subr.mxu0 0.0
    %420 = vmatpush1.msra.mxu0 %v395
    %421 = vmatprep.subr.mxu0 0.0
    %422 = vmatpush1.msra.mxu0 %v396
    %423 = vmatprep.subr.mxu0 0.0
    %424 = vmatpush1.msra.mxu0 %v397
    %425 = vmatprep.subr.mxu0 0.0
    %426 = vmatpush1.msra.mxu0 %v398
    %427 = vmatprep.subr.mxu0 0.0
    %428 = vmatpush1.msra.mxu0 %v399
    %429 = vmatprep.subr.mxu0 0.0
    %430 = vmatpush1.msra.mxu0 %v400
    %431 = vmatprep.subr.mxu0 0.0
    %432 = vmatpush1.msra.mxu0 %v401
    %433 = vmatprep.subr.mxu0 0.0
    %434 = vmatpush1.msra.mxu0 %v402
    %435 = vmatprep.subr.mxu0 0.0
    %436 = vmatpush1.msra.mxu0 0.0
    %437 = vmatprep.subr.mxu0 0.0
    %438 = vmatpush1.msra.mxu0 0.0
    %439 = vmatprep.subr.mxu0 0.0
    %440 = vmatpush1.msra.mxu0 0.0
    %441 = vmatprep.subr.mxu0 0.0
    %442 = vmatpush1.msra.mxu0 0.0
    %443 = vmatprep.subr.mxu0 0.0
    %444 = vmatpush1.msra.mxu0 0.0
    %445 = vmatprep.subr.mxu0 0.0
    %446 = vmatpush1.msra.mxu0 0.0
    %447 = vmatprep.subr.mxu0 0.0
    %448 = vmatpush1.msra.mxu0 0.0
    %449 = vmatprep.subr.mxu0 0.0
    %450 = vmatpush1.msra.mxu0 0.0
    %451 = vmatprep.subr.mxu0 0.0
    %452 = vmatpush1.msra.mxu0 0.0
    %453 = vmatprep.subr.mxu0 0.0
    %454 = vmatpush1.msra.mxu0 0.0
    %455 = vmatprep.subr.mxu0 0.0
    %456 = vmatpush1.msra.mxu0 0.0
    %457 = vmatprep.subr.mxu0 0.0
    %458 = vmatpush1.msra.mxu0 0.0
    %459 = vmatprep.subr.mxu0 0.0
    %460 = vmatpush1.msra.mxu0 0.0
    %461 = vmatprep.subr.mxu0 0.0
    %462 = vmatpush1.msra.mxu0 0.0
    %463 = vmatprep.subr.mxu0 0.0
    %464 = vmatpush1.msra.mxu0 0.0
    %465 = vmatprep.subr.mxu0 0.0
    %466 = vmatpush1.msra.mxu0 0.0
    %467 = vmatprep.mubr.f32.mxu0 0.0
    %468 = vmatmul.mubr.f32.gmra.mrb[0].mxu0 %v386
    %v469 = vpop.f32.mrb[0].mxu0
    %v470 = vadd.f32 0.0, %v469
    %v471 = vpop.f32.mrb[0].mxu0
    %472 = vdwg.mxu0
    %v473 = vmax.f32 %v470, 1e-30
    %v474 = vrcp.pop %v473
    %v475 = vmul.f32 %v386, %v474
    %476 = vst [vmem:[#allocation12] sm:$0xff] %v475
    // Predicated region
    $region54: #{tpu_custom_call.1} parent=1 // pred_check
      _
    $region55: #{tpu_custom_call.1} parent=1 // pred_check_branch
      %478 = sbr.rel (0) target = $region57
    $region56: #{tpu_custom_call.1} parent=1 // pred_region
      %s480 = ssub.s32 128, 128
      %481 = vsyncadd [#allocation4], %s480
      %s483 = sshll.u32 [#allocation11], 4
      %s484 = int_to_ptr.vmem [resolvable:$true] %s483
      %486 = dma.vmem_to_hbm [thread:$0]  %s484, 128, %s8, [#allocation4]
    $region57: #{tpu_custom_call.1} parent=1 // pred_fallthru
      _
    // Predicated region
    $region58: #{tpu_custom_call.1} parent=1 // pred_check
      _
    $region59: #{tpu_custom_call.1} parent=1 // pred_check_branch
      %488 = sbr.rel (0) target = $region61
    $region60: #{tpu_custom_call.1} parent=1 // pred_region
      %s490 = ssub.s32 128, 128
      %491 = vsyncadd [#allocation13], %s490
      %s493 = sshll.u32 [#allocation12], 4
      %s494 = int_to_ptr.vmem [resolvable:$true] %s493
      %496 = dma.vmem_to_hbm [thread:$0]  %s494, 128, %s9, [#allocation13]
    $region61: #{tpu_custom_call.1} parent=1 // pred_fallthru
      _
    // Predicated region
    $region62: #{tpu_custom_call.1} parent=1 // pred_check
      _
    $region63: #{tpu_custom_call.1} parent=1 // pred_check_branch
      %498 = sbr.rel (0) target = $region65
    $region64: #{tpu_custom_call.1} parent=1 // pred_region
      %499 = dma.done [#allocation4], 128
    $region65: #{tpu_custom_call.1} parent=1 // pred_fallthru
      _
    // Predicated region
    $region66: #{tpu_custom_call.1} parent=1 // pred_check
      _
    $region67: #{tpu_custom_call.1} parent=1 // pred_check_branch
      %501 = sbr.rel (0) target = $region69
    $region68: #{tpu_custom_call.1} parent=1 // pred_region
      %502 = dma.done [#allocation13], 128
    $region69: #{tpu_custom_call.1} parent=1 // pred_fallthru
      _
    %503 = vsyncpa [#allocation3], 1
    %504 = vsyncpa [#allocation6], 1
    %505 = vsyncpa [#allocation9], 1
    %506 = vsyncpa [#allocation4], 1
    %507 = vsyncpa [#allocation13], 1

</llo_original>
